<compile_context>
chip_gen: v7x
topology: tpu7x:2x2x1
jax: 0.10.0
libtpu: 0.0.40
codegen_flags: <defaults>
</compile_context>

<pallas_src>
import functools

import jax
import jax.numpy as jnp
from jax.experimental import pallas as pl
from jax.experimental.pallas import tpu as pltpu


# ----------------------------------------------------------------------------
# Single fused kernel (per block of TB nodes / TB*K neighbor rows):
#   nodes_fea = nodes_raw @ Wu + bu                                 [TB, D]
#   neighs    = neigh_raw @ Wi + bi                                 [TB*K, D]
#   q         = nodes_fea + n_feature                               [TB, D]
#   qW        = q @ W1q            (hoisted: one batched matmul)    [TB, D]
#   h1        = relu(neighs @ W1n + qW (bcast over K) + b1)
#   h2        = relu(h1 @ W2 + b2)
#   s         = sum(h2 * w3_row, lane axis) + b3   (VPU mul + XLU reduce)
#   att       = softmax over K per node
#   agg       = sum_k att[:,k] * neighs[:,k]                        [TB, D]
# ----------------------------------------------------------------------------
def _fused_aggregator_kernel(
    nodes_raw_ref, neigh_raw_ref, nfea_ref,
    u_w_ref, u_b_ref, i_w_ref, i_b_ref,
    w1n_ref, w1q_ref, b1_ref, w2_ref, b2_ref, w3_ref, b3_ref,
    nodes_fea_ref, agg_ref,
):
    f32 = jnp.float32
    bf16 = jnp.bfloat16
    TB, D = nfea_ref.shape
    K = neigh_raw_ref.shape[0] // TB

    def mxu(a, w):
        # bf16 MXU inputs, f32 accumulation (fast path on v6e/v7x, fine on v5e).
        return jnp.dot(a.astype(bf16), w.astype(bf16), preferred_element_type=f32)

    # ---- u-projection of the node block (L0Dense @ eval)               [TB, D]
    nodes_fea = mxu(nodes_raw_ref[...], u_w_ref[...]) + u_b_ref[...]
    nodes_fea_ref[...] = nodes_fea.astype(nodes_fea_ref.dtype)

    # ---- i-projection of all TB*K neighbor rows (fused, no HBM round trip)
    neighs = mxu(neigh_raw_ref[...], i_w_ref[...]) + i_b_ref[...]       # [TB*K, D]

    # ---- query projection, hoisted out of the per-neighbor MLP         [TB, D]
    q = nodes_fea + nfea_ref[...]              # mean over the single node row
    qW = mxu(q, w1q_ref[...])

    # ---- attention MLP on all neighbor rows at once
    h1 = mxu(neighs, w1n_ref[...]) + b1_ref[...]                        # [TB*K, D]
    h1 = jnp.maximum(h1.reshape(TB, K, D) + qW[:, None, :], 0.0)        # [TB, K, D]
    h2 = mxu(h1.reshape(TB * K, D), w2_ref[...]) + b2_ref[...]
    h2 = jnp.maximum(h2, 0.0).reshape(TB, K, D)

    # ---- scores via VPU multiply + lane reduction (no 1-lane-wide matmul)
    s = jnp.sum(h2 * w3_ref[...], axis=-1, keepdims=True) + b3_ref[...]  # [TB, K, 1]

    # ---- numerically-stable softmax over the K neighbors (dim=0 in reference)
    s = s - jnp.max(s, axis=1, keepdims=True)
    e = jnp.exp(s)
    att = e * pl.reciprocal(jnp.sum(e, axis=1, keepdims=True), approx=True)

    # ---- weighted aggregation: (neighs.T @ att).T                      [TB, D]
    agg = jnp.sum(att * neighs.reshape(TB, K, D), axis=1)
    agg_ref[...] = agg.astype(agg_ref.dtype)


def fused_aggregate(nodes_raw, neigh_raw, n_feature, params, *, K, block_nodes=128):
    B, FU = nodes_raw.shape
    FI = neigh_raw.shape[1]
    D = params["u_w"].shape[1]

    # Node-block tiling: whole batch in one block when small, otherwise
    # 128-row blocks (multiple of 8 sublanes / MXU M-tiles).
    if B <= block_nodes:
        TB, B_pad = B, B
    else:
        TB = block_nodes
        B_pad = pl.cdiv(B, TB) * TB

    pad = B_pad - B
    if pad:
        nodes_raw = jnp.pad(nodes_raw, ((0, pad), (0, 0)))
        n_feature = jnp.pad(n_feature, ((0, pad), (0, 0)))
        neigh_raw = jnp.pad(neigh_raw, ((0, pad * K), (0, 0)))

    full = lambda i: (0, 0)
    blk = lambda i: (i, 0)

    nodes_fea, agg = pl.pallas_call(
        _fused_aggregator_kernel,
        out_shape=(
            jax.ShapeDtypeStruct((B_pad, D), jnp.float32),
            jax.ShapeDtypeStruct((B_pad, D), jnp.float32),
        ),
        grid=(B_pad // TB,),
        in_specs=[
            pl.BlockSpec((TB, FU), blk),          # nodes_raw
            pl.BlockSpec((TB * K, FI), blk),      # neigh_raw
            pl.BlockSpec((TB, D), blk),           # n_feature
            pl.BlockSpec((FU, D), full),          # u_w
            pl.BlockSpec((1, D), full),           # u_b
            pl.BlockSpec((FI, D), full),          # i_w
            pl.BlockSpec((1, D), full),           # i_b
            pl.BlockSpec((D, D), full),           # att_w1n
            pl.BlockSpec((D, D), full),           # att_w1q
            pl.BlockSpec((1, D), full),           # att_b1
            pl.BlockSpec((D, D), full),           # att_w2
            pl.BlockSpec((1, D), full),           # att_b2
            pl.BlockSpec((1, D), full),           # att_w3 (row form of Linear(D->1))
            pl.BlockSpec((1, 1), full),           # att_b3
        ],
        out_specs=(
            pl.BlockSpec((TB, D), blk),           # nodes_fea  (lane-dense slab)
            pl.BlockSpec((TB, D), blk),           # aggregated embeddings
        ),
        compiler_params=pltpu.CompilerParams(
            dimension_semantics=("parallel",)),   # node blocks shard across TCs on v7x
    )(
        nodes_raw, neigh_raw, n_feature,
        params["u_w"], params["u_b"],
        params["i_w"], params["i_b"],
        params["att_w1n"], params["att_w1q"], params["att_b1"],
        params["att_w2"], params["att_b2"],
        params["att_w3"], params["att_b3"],
    )
    return nodes_fea[:B], agg[:B]


# ----------------------------------------------------------------------------
# aggregator.forward  (is_user_part=True path)
# ----------------------------------------------------------------------------
@functools.partial(jax.jit, static_argnames=("block_nodes",))
def aggregator_forward(nodes, n_feature, params, adj_idx, u_weight, i_weight,
                       embed_matrix, *, block_nodes=128):
    K = adj_idx.shape[1]

    # Raw embedding-row gathers.
    # TODO(synk): gather rows inside the kernel via scalar-prefetch index_maps
    # to avoid materializing [B*K, Fi] in HBM at production sizes.
    nodes_raw = u_weight[nodes]                                  # [B, Fu]
    neigh_raw = i_weight[adj_idx[nodes].reshape(-1)]             # [B*K, Fi]

    nodes_fea, agg = fused_aggregate(
        nodes_raw, neigh_raw, n_feature, params, K=K, block_nodes=block_nodes)

    # embed_matrix[nodes] = aggregated embeddings; caller owns/reuses the
    # buffer so only the B touched rows are written (mirrors torch row writes).
    embed_matrix = embed_matrix.at[nodes].set(agg)
    return nodes_fea, embed_matrix


# ----------------------------------------------------------------------------
# Deterministic parameter construction
# ----------------------------------------------------------------------------
def make_params(key, fu, fi, d):
    ks = jax.random.split(key, 8)
    s = 0.1
    return {
        "u_w": s * jax.random.normal(ks[0], (fu, d), jnp.float32),
        "u_b": s * jax.random.normal(ks[1], (1, d), jnp.float32),
        "i_w": s * jax.random.normal(ks[2], (fi, d), jnp.float32),
        "i_b": s * jax.random.normal(ks[3], (1, d), jnp.float32),
        # attention Linear(2D->D) split row-wise as [W1n; W1q] (neighbor / query halves)
        "att_w1n": s * jax.random.normal(ks[4], (d, d), jnp.float32),
        "att_w1q": s * jax.random.normal(ks[5], (d, d), jnp.float32),
        "att_b1": jnp.zeros((1, d), jnp.float32),
        "att_w2": s * jax.random.normal(ks[6], (d, d), jnp.float32),
        "att_b2": jnp.zeros((1, d), jnp.float32),
        "att_w3": s * jax.random.normal(ks[7], (1, d), jnp.float32),  # Linear(D->1) weight row
        "att_b3": jnp.zeros((1, 1), jnp.float32),
    }


if __name__ == "__main__":
    key = jax.random.PRNGKey(0)
    k_emb_u, k_emb_i, k_adj, k_nodes, k_nfea, k_par = jax.random.split(key, 6)

    NUM_U, NUM_I = 32, 64          # embedding table sizes
    FU, FI = 48, 40                # raw embedding dims of u_feature / i_feature
    D = 32                         # embed_dim
    B = 8                          # number of query nodes
    K = 8                          # neighbors per node (< threshold=24, no a_res sampling)

    u_weight = 0.1 * jax.random.normal(k_emb_u, (NUM_U, FU), jnp.float32)
    i_weight = 0.1 * jax.random.normal(k_emb_i, (NUM_I, FI), jnp.float32)
    adj_idx = jax.random.randint(k_adj, (NUM_U, K), 0, NUM_I, dtype=jnp.int32)
    nodes = jax.random.permutation(k_nodes, NUM_U)[:B].astype(jnp.int32)
    n_feature = 0.1 * jax.random.normal(k_nfea, (B, D), jnp.float32)
    params = make_params(k_par, FU, FI, D)

    # TODO(synk): torch.empty leaves untouched rows uninitialized; here the
    # caller provides a zero buffer (reusable / donatable across steps).
    embed_matrix = jnp.zeros((NUM_U, D), jnp.float32)

    nodes_fea, embed_matrix = aggregator_forward(
        nodes, n_feature, params, adj_idx, u_weight, i_weight, embed_matrix)
    jax.block_until_ready((nodes_fea, embed_matrix))

    assert nodes_fea.shape == (B, D)
    assert embed_matrix.shape == (NUM_U, D)
    assert bool(jnp.all(jnp.isfinite(nodes_fea)))
    assert bool(jnp.all(jnp.isfinite(embed_matrix)))
    print("KERNEL_OK")
</pallas_src>

<mosaic_0001>
module attributes {stable_mosaic.version = 11 : i64} {
  func.func @_fused_aggregator_kernel(%arg0: i32, %arg1: memref<8x48xf32, #tpu.memory_space<vmem>>, %arg2: memref<64x40xf32, #tpu.memory_space<vmem>>, %arg3: memref<8x32xf32, #tpu.memory_space<vmem>>, %arg4: memref<48x32xf32, #tpu.memory_space<vmem>>, %arg5: memref<1x32xf32, #tpu.memory_space<vmem>>, %arg6: memref<40x32xf32, #tpu.memory_space<vmem>>, %arg7: memref<1x32xf32, #tpu.memory_space<vmem>>, %arg8: memref<32x32xf32, #tpu.memory_space<vmem>>, %arg9: memref<32x32xf32, #tpu.memory_space<vmem>>, %arg10: memref<1x32xf32, #tpu.memory_space<vmem>>, %arg11: memref<32x32xf32, #tpu.memory_space<vmem>>, %arg12: memref<1x32xf32, #tpu.memory_space<vmem>>, %arg13: memref<1x32xf32, #tpu.memory_space<vmem>>, %arg14: memref<1x1xf32, #tpu.memory_space<vmem>>, %arg15: memref<8x32xf32, #tpu.memory_space<vmem>>, %arg16: memref<8x32xf32, #tpu.memory_space<vmem>>) attributes {dimension_semantics = [#tpu.dimension_semantics<parallel>], iteration_bounds = array<i64: 1>, scalar_prefetch = 0 : i64, scratch_operands = 0 : i64, tpu.core_type = #tpu.core_type<tc>, window_params = [{transform_indices = @transform_0, window_bounds = array<i64: 8, 48>}, {transform_indices = @transform_1, window_bounds = array<i64: 64, 40>}, {transform_indices = @transform_2, window_bounds = array<i64: 8, 32>}, {pipeline_mode = #tpu.pipeline_mode<synchronous>, transform_indices = @transform_3, window_bounds = array<i64: 48, 32>}, {pipeline_mode = #tpu.pipeline_mode<synchronous>, transform_indices = @transform_4, window_bounds = array<i64: 1, 32>}, {pipeline_mode = #tpu.pipeline_mode<synchronous>, transform_indices = @transform_5, window_bounds = array<i64: 40, 32>}, {pipeline_mode = #tpu.pipeline_mode<synchronous>, transform_indices = @transform_6, window_bounds = array<i64: 1, 32>}, {pipeline_mode = #tpu.pipeline_mode<synchronous>, transform_indices = @transform_7, window_bounds = array<i64: 32, 32>}, {pipeline_mode = #tpu.pipeline_mode<synchronous>, transform_indices = @transform_8, window_bounds = array<i64: 32, 32>}, {pipeline_mode = #tpu.pipeline_mode<synchronous>, transform_indices = @transform_9, window_bounds = array<i64: 1, 32>}, {pipeline_mode = #tpu.pipeline_mode<synchronous>, transform_indices = @transform_10, window_bounds = array<i64: 32, 32>}, {pipeline_mode = #tpu.pipeline_mode<synchronous>, transform_indices = @transform_11, window_bounds = array<i64: 1, 32>}, {pipeline_mode = #tpu.pipeline_mode<synchronous>, transform_indices = @transform_12, window_bounds = array<i64: 1, 32>}, {pipeline_mode = #tpu.pipeline_mode<synchronous>, transform_indices = @transform_13, window_bounds = array<i64: 1, 1>}, {transform_indices = @transform_14, window_bounds = array<i64: 8, 32>}, {transform_indices = @transform_15, window_bounds = array<i64: 8, 32>}]} {
    %c0 = arith.constant 0 : index
    %c0_0 = arith.constant 0 : index
    %0 = vector.load %arg1[%c0, %c0_0] : memref<8x48xf32, #tpu.memory_space<vmem>>, vector<8x48xf32>
    %c0_1 = arith.constant 0 : index
    %c0_2 = arith.constant 0 : index
    %1 = vector.load %arg4[%c0_1, %c0_2] : memref<48x32xf32, #tpu.memory_space<vmem>>, vector<48x32xf32>
    %2 = arith.truncf %0 : vector<8x48xf32> to vector<8x48xbf16>
    %3 = arith.truncf %1 : vector<48x32xf32> to vector<48x32xbf16>
    %cst = arith.constant dense<0.000000e+00> : vector<8x32xf32>
    %4 = tpu.matmul %2, %3, %cst {dimension_numbers = #tpu.dot_dimension_numbers<[1], [0], [0], [1], [0, 0, 1, 1], [], []>} : vector<8x48xbf16>, vector<48x32xbf16>, vector<8x32xf32> -> vector<8x32xf32>
    %c0_3 = arith.constant 0 : index
    %c0_4 = arith.constant 0 : index
    %5 = vector.load %arg5[%c0_3, %c0_4] : memref<1x32xf32, #tpu.memory_space<vmem>>, vector<1x32xf32>
    %6 = vector.broadcast %5 : vector<1x32xf32> to vector<8x32xf32>
    %7 = arith.addf %4, %6 : vector<8x32xf32>
    %c0_5 = arith.constant 0 : index
    %c0_6 = arith.constant 0 : index
    %8 = vector.load %arg15[%c0_5, %c0_6] : memref<8x32xf32, #tpu.memory_space<vmem>>, vector<8x32xf32>
    tpu.vector_store %arg15[%c0_5, %c0_6], %7 {strides = array<i32>} : memref<8x32xf32, #tpu.memory_space<vmem>>, vector<8x32xf32>,
    %c0_7 = arith.constant 0 : index
    %c0_8 = arith.constant 0 : index
    %9 = vector.load %arg2[%c0_7, %c0_8] : memref<64x40xf32, #tpu.memory_space<vmem>>, vector<64x40xf32>
    %c0_9 = arith.constant 0 : index
    %c0_10 = arith.constant 0 : index
    %10 = vector.load %arg6[%c0_9, %c0_10] : memref<40x32xf32, #tpu.memory_space<vmem>>, vector<40x32xf32>
    %11 = arith.truncf %9 : vector<64x40xf32> to vector<64x40xbf16>
    %12 = arith.truncf %10 : vector<40x32xf32> to vector<40x32xbf16>
    %cst_11 = arith.constant dense<0.000000e+00> : vector<64x32xf32>
    %13 = tpu.matmul %11, %12, %cst_11 {dimension_numbers = #tpu.dot_dimension_numbers<[1], [0], [0], [1], [0, 0, 1, 1], [], []>} : vector<64x40xbf16>, vector<40x32xbf16>, vector<64x32xf32> -> vector<64x32xf32>
    %c0_12 = arith.constant 0 : index
    %c0_13 = arith.constant 0 : index
    %14 = vector.load %arg7[%c0_12, %c0_13] : memref<1x32xf32, #tpu.memory_space<vmem>>, vector<1x32xf32>
    %15 = vector.broadcast %14 : vector<1x32xf32> to vector<64x32xf32>
    %16 = arith.addf %13, %15 : vector<64x32xf32>
    %c0_14 = arith.constant 0 : index
    %c0_15 = arith.constant 0 : index
    %17 = vector.load %arg3[%c0_14, %c0_15] : memref<8x32xf32, #tpu.memory_space<vmem>>, vector<8x32xf32>
    %18 = arith.addf %7, %17 : vector<8x32xf32>
    %c0_16 = arith.constant 0 : index
    %c0_17 = arith.constant 0 : index
    %19 = vector.load %arg9[%c0_16, %c0_17] : memref<32x32xf32, #tpu.memory_space<vmem>>, vector<32x32xf32>
    %20 = arith.truncf %18 : vector<8x32xf32> to vector<8x32xbf16>
    %21 = arith.truncf %19 : vector<32x32xf32> to vector<32x32xbf16>
    %cst_18 = arith.constant dense<0.000000e+00> : vector<8x32xf32>
    %22 = tpu.matmul %20, %21, %cst_18 {dimension_numbers = #tpu.dot_dimension_numbers<[1], [0], [0], [1], [0, 0, 1, 1], [], []>} : vector<8x32xbf16>, vector<32x32xbf16>, vector<8x32xf32> -> vector<8x32xf32>
    %c0_19 = arith.constant 0 : index
    %c0_20 = arith.constant 0 : index
    %23 = vector.load %arg8[%c0_19, %c0_20] : memref<32x32xf32, #tpu.memory_space<vmem>>, vector<32x32xf32>
    %24 = arith.truncf %16 : vector<64x32xf32> to vector<64x32xbf16>
    %25 = arith.truncf %23 : vector<32x32xf32> to vector<32x32xbf16>
    %cst_21 = arith.constant dense<0.000000e+00> : vector<64x32xf32>
    %26 = tpu.matmul %24, %25, %cst_21 {dimension_numbers = #tpu.dot_dimension_numbers<[1], [0], [0], [1], [0, 0, 1, 1], [], []>} : vector<64x32xbf16>, vector<32x32xbf16>, vector<64x32xf32> -> vector<64x32xf32>
    %c0_22 = arith.constant 0 : index
    %c0_23 = arith.constant 0 : index
    %27 = vector.load %arg10[%c0_22, %c0_23] : memref<1x32xf32, #tpu.memory_space<vmem>>, vector<1x32xf32>
    %28 = vector.broadcast %27 : vector<1x32xf32> to vector<64x32xf32>
    %29 = arith.addf %26, %28 : vector<64x32xf32>
    %30 = vector.shape_cast %29 : vector<64x32xf32> to vector<8x8x32xf32>
    %31 = vector.shape_cast %22 : vector<8x32xf32> to vector<8x1x32xf32>
    %32 = vector.broadcast %31 : vector<8x1x32xf32> to vector<8x8x32xf32>
    %33 = arith.addf %30, %32 : vector<8x8x32xf32>
    %cst_24 = arith.constant 0.000000e+00 : f32
    %34 = vector.broadcast %cst_24 : f32 to vector<8x8x32xf32>
    %35 = arith.maximumf %33, %34 : vector<8x8x32xf32>
    %36 = vector.shape_cast %35 : vector<8x8x32xf32> to vector<64x32xf32>
    %c0_25 = arith.constant 0 : index
    %c0_26 = arith.constant 0 : index
    %37 = vector.load %arg11[%c0_25, %c0_26] : memref<32x32xf32, #tpu.memory_space<vmem>>, vector<32x32xf32>
    %38 = arith.truncf %36 : vector<64x32xf32> to vector<64x32xbf16>
    %39 = arith.truncf %37 : vector<32x32xf32> to vector<32x32xbf16>
    %cst_27 = arith.constant dense<0.000000e+00> : vector<64x32xf32>
    %40 = tpu.matmul %38, %39, %cst_27 {dimension_numbers = #tpu.dot_dimension_numbers<[1], [0], [0], [1], [0, 0, 1, 1], [], []>} : vector<64x32xbf16>, vector<32x32xbf16>, vector<64x32xf32> -> vector<64x32xf32>
    %c0_28 = arith.constant 0 : index
    %c0_29 = arith.constant 0 : index
    %41 = vector.load %arg12[%c0_28, %c0_29] : memref<1x32xf32, #tpu.memory_space<vmem>>, vector<1x32xf32>
    %42 = vector.broadcast %41 : vector<1x32xf32> to vector<64x32xf32>
    %43 = arith.addf %40, %42 : vector<64x32xf32>
    %cst_30 = arith.constant 0.000000e+00 : f32
    %44 = vector.broadcast %cst_30 : f32 to vector<64x32xf32>
    %45 = arith.maximumf %43, %44 : vector<64x32xf32>
    %46 = vector.shape_cast %45 : vector<64x32xf32> to vector<8x8x32xf32>
    %c0_31 = arith.constant 0 : index
    %c0_32 = arith.constant 0 : index
    %47 = vector.load %arg13[%c0_31, %c0_32] : memref<1x32xf32, #tpu.memory_space<vmem>>, vector<1x32xf32>
    %48 = vector.shape_cast %47 : vector<1x32xf32> to vector<1x1x32xf32>
    %49 = vector.broadcast %48 : vector<1x1x32xf32> to vector<8x8x32xf32>
    %50 = arith.mulf %46, %49 : vector<8x8x32xf32>
    %cst_33 = arith.constant dense<0.000000e+00> : vector<8x8xf32>
    %51 = vector.multi_reduction <add>, %50, %cst_33 [2] : vector<8x8x32xf32> to vector<8x8xf32>
    %52 = vector.shape_cast %51 : vector<8x8xf32> to vector<8x8x1xf32>
    %c0_34 = arith.constant 0 : index
    %c0_35 = arith.constant 0 : index
    %53 = vector.load %arg14[%c0_34, %c0_35] : memref<1x1xf32, #tpu.memory_space<vmem>>, vector<1x1xf32>
    %54 = vector.shape_cast %53 : vector<1x1xf32> to vector<1x1x1xf32>
    %55 = vector.broadcast %54 : vector<1x1x1xf32> to vector<8x8x1xf32>
    %56 = arith.addf %52, %55 : vector<8x8x1xf32>
    %cst_36 = arith.constant dense<0xFF800000> : vector<8x1xf32>
    %57 = vector.multi_reduction <maximumf>, %56, %cst_36 [1] : vector<8x8x1xf32> to vector<8x1xf32>
    %58 = vector.shape_cast %57 : vector<8x1xf32> to vector<8x1x1xf32>
    %59 = vector.broadcast %58 : vector<8x1x1xf32> to vector<8x8x1xf32>
    %60 = arith.subf %56, %59 : vector<8x8x1xf32>
    %61 = math.exp %60 : vector<8x8x1xf32>
    %cst_37 = arith.constant dense<0.000000e+00> : vector<8x1xf32>
    %62 = vector.multi_reduction <add>, %61, %cst_37 [1] : vector<8x8x1xf32> to vector<8x1xf32>
    %63 = vector.shape_cast %62 : vector<8x1xf32> to vector<8x1x1xf32>
    %64 = tpu.reciprocal %63 {approx = true} : vector<8x1x1xf32> -> vector<8x1x1xf32>
    %65 = vector.broadcast %64 : vector<8x1x1xf32> to vector<8x8x1xf32>
    %66 = arith.mulf %61, %65 : vector<8x8x1xf32>
    %67 = vector.shape_cast %16 : vector<64x32xf32> to vector<8x8x32xf32>
    %68 = vector.broadcast %66 : vector<8x8x1xf32> to vector<8x8x32xf32>
    %69 = arith.mulf %68, %67 : vector<8x8x32xf32>
    %cst_38 = arith.constant dense<0.000000e+00> : vector<8x32xf32>
    %70 = vector.multi_reduction <add>, %69, %cst_38 [1] : vector<8x8x32xf32> to vector<8x32xf32>
    %c0_39 = arith.constant 0 : index
    %c0_40 = arith.constant 0 : index
    %71 = vector.load %arg16[%c0_39, %c0_40] : memref<8x32xf32, #tpu.memory_space<vmem>>, vector<8x32xf32>
    tpu.vector_store %arg16[%c0_39, %c0_40], %70 {strides = array<i32>} : memref<8x32xf32, #tpu.memory_space<vmem>>, vector<8x32xf32>,
    return
  }
  func.func @transform_0(%arg0: i32) -> (i32, i32) {
    %c0_i32 = arith.constant 0 : i32
    %c0_i32_0 = arith.constant 0 : i32
    return %arg0, %c0_i32 : i32, i32
  }
  func.func @transform_1(%arg0: i32) -> (i32, i32) {
    %c0_i32 = arith.constant 0 : i32
    %c0_i32_0 = arith.constant 0 : i32
    return %arg0, %c0_i32 : i32, i32
  }
  func.func @transform_2(%arg0: i32) -> (i32, i32) {
    %c0_i32 = arith.constant 0 : i32
    %c0_i32_0 = arith.constant 0 : i32
    return %arg0, %c0_i32 : i32, i32
  }
  func.func @transform_3(%arg0: i32) -> (i32, i32) {
    %c0_i32 = arith.constant 0 : i32
    %c0_i32_0 = arith.constant 0 : i32
    %c0_i32_1 = arith.constant 0 : i32
    return %c0_i32, %c0_i32_0 : i32, i32
  }
  func.func @transform_4(%arg0: i32) -> (i32, i32) {
    %c0_i32 = arith.constant 0 : i32
    %c0_i32_0 = arith.constant 0 : i32
    %c0_i32_1 = arith.constant 0 : i32
    return %c0_i32, %c0_i32_0 : i32, i32
  }
  func.func @transform_5(%arg0: i32) -> (i32, i32) {
    %c0_i32 = arith.constant 0 : i32
    %c0_i32_0 = arith.constant 0 : i32
    %c0_i32_1 = arith.constant 0 : i32
    return %c0_i32, %c0_i32_0 : i32, i32
  }
  func.func @transform_6(%arg0: i32) -> (i32, i32) {
    %c0_i32 = arith.constant 0 : i32
    %c0_i32_0 = arith.constant 0 : i32
    %c0_i32_1 = arith.constant 0 : i32
    return %c0_i32, %c0_i32_0 : i32, i32
  }
  func.func @transform_7(%arg0: i32) -> (i32, i32) {
    %c0_i32 = arith.constant 0 : i32
    %c0_i32_0 = arith.constant 0 : i32
    %c0_i32_1 = arith.constant 0 : i32
    return %c0_i32, %c0_i32_0 : i32, i32
  }
  func.func @transform_8(%arg0: i32) -> (i32, i32) {
    %c0_i32 = arith.constant 0 : i32
    %c0_i32_0 = arith.constant 0 : i32
    %c0_i32_1 = arith.constant 0 : i32
    return %c0_i32, %c0_i32_0 : i32, i32
  }
  func.func @transform_9(%arg0: i32) -> (i32, i32) {
    %c0_i32 = arith.constant 0 : i32
    %c0_i32_0 = arith.constant 0 : i32
    %c0_i32_1 = arith.constant 0 : i32
    return %c0_i32, %c0_i32_0 : i32, i32
  }
  func.func @transform_10(%arg0: i32) -> (i32, i32) {
    %c0_i32 = arith.constant 0 : i32
    %c0_i32_0 = arith.constant 0 : i32
    %c0_i32_1 = arith.constant 0 : i32
    return %c0_i32, %c0_i32_0 : i32, i32
  }
  func.func @transform_11(%arg0: i32) -> (i32, i32) {
    %c0_i32 = arith.constant 0 : i32
    %c0_i32_0 = arith.constant 0 : i32
    %c0_i32_1 = arith.constant 0 : i32
    return %c0_i32, %c0_i32_0 : i32, i32
  }
  func.func @transform_12(%arg0: i32) -> (i32, i32) {
    %c0_i32 = arith.constant 0 : i32
    %c0_i32_0 = arith.constant 0 : i32
    %c0_i32_1 = arith.constant 0 : i32
    return %c0_i32, %c0_i32_0 : i32, i32
  }
  func.func @transform_13(%arg0: i32) -> (i32, i32) {
    %c0_i32 = arith.constant 0 : i32
    %c0_i32_0 = arith.constant 0 : i32
    %c0_i32_1 = arith.constant 0 : i32
    return %c0_i32, %c0_i32_0 : i32, i32
  }
  func.func @transform_14(%arg0: i32) -> (i32, i32) {
    %c0_i32 = arith.constant 0 : i32
    %c0_i32_0 = arith.constant 0 : i32
    return %arg0, %c0_i32 : i32, i32
  }
  func.func @transform_15(%arg0: i32) -> (i32, i32) {
    %c0_i32 = arith.constant 0 : i32
    %c0_i32_0 = arith.constant 0 : i32
    return %arg0, %c0_i32 : i32, i32
  }
}

</mosaic_0001>

<llo_original>
// kernel: aggregator_forward.1
$region0: #{aggregator_forward.1}
  #allocation0 [shape = 'u32[]', space=smem, size = 0x4, offset = 0x4, fixed_abs, tag = 'smem constant byte address 0x4 - core index']
  #allocation1 [shape = 'u32[144,128]{1,0:T(1,128)}', space=vmem, size = 0x12000, scoped, tag = 'internal scratch']
  #allocation2 [shape = 'f32[1,1]{1,0:T(1,128)S(1)}', space=vmem, size = 0x200, scoped, tag = 'scoped memory for aggregator_forward.1']
  %s0 = inlined_call_operand.vmem [shape: f32[8,48], index: 0, kind: input, shape index: {}]
  %s1 = inlined_call_operand.vmem [shape: f32[64,40], index: 1, kind: input, shape index: {}]
  %s2 = inlined_call_operand.vmem [shape: f32[8,32], index: 2, kind: input, shape index: {}]
  %s3 = inlined_call_operand.vmem [shape: f32[48,32], index: 3, kind: input, shape index: {}]
  %s4 = inlined_call_operand.vmem [shape: f32[1,32], index: 4, kind: input, shape index: {}]
  %s5 = inlined_call_operand.vmem [shape: f32[40,32], index: 5, kind: input, shape index: {}]
  %s6 = inlined_call_operand.vmem [shape: f32[1,32], index: 6, kind: input, shape index: {}]
  %s7 = inlined_call_operand.vmem [shape: f32[32,32], index: 7, kind: input, shape index: {}]
  %s8 = inlined_call_operand.vmem [shape: f32[32,32], index: 8, kind: input, shape index: {}]
  %s9 = inlined_call_operand.vmem [shape: f32[1,32], index: 9, kind: input, shape index: {}]
  %s10 = inlined_call_operand.vmem [shape: f32[32,32], index: 10, kind: input, shape index: {}]
  %s11 = inlined_call_operand.vmem [shape: f32[1,32], index: 11, kind: input, shape index: {}]
  %s12 = inlined_call_operand.vmem [shape: f32[1,32], index: 12, kind: input, shape index: {}]
  %s13 = inlined_call_operand.<no memory space> [shape: f32[1,1], index: 13, kind: input, shape index: {}]
  %s14 = inlined_call_operand.hbm [shape: f32[8,32], index: 14, kind: output, shape index: {0}]
  %s15 = inlined_call_operand.vmem [shape: f32[8,32], index: 15, kind: output, shape index: {1}]
  %16 = xla_tuple %s14, %s15
  %s17 = sld [smem:[#allocation0]]
  $region74: #{aggregator_forward.1} parent=0
    _
  %s19 = ssub.s32 1, %s17
  %s20 = scalar_select 0, %s19, %s17
  %v21 = vstv %s13
  %22 = vst [vmem:[#allocation2] sm:$0x1] %v21
  $region1: #{aggregator_forward.1} parent=0
    #allocation3 [shape = 'u8[4096]{0}', space=vmem, size = 0x1000, scoped, tag = 'output window, operand 0, single buffered']
    #allocation4 [shape = 's32[1]{0}', space=sflag, size = 0x4, scoped, tag = 'scoped memory for aggregator_forward.1']
    %23 = vsyncpa [#allocation4], 0
    // Predicated region
    $region2: #{aggregator_forward.1} parent=1 // pred_check
      _
    $region3: #{aggregator_forward.1} parent=1 // pred_check_branch
      %25 = sbr.rel (0) target = $region5
    $region4: #{aggregator_forward.1} parent=1 // pred_region
      _
    $region5: #{aggregator_forward.1} parent=1 // pred_fallthru
      _
    // Predicated region
    $region6: #{aggregator_forward.1} parent=1 // pred_check
      _
    $region7: #{aggregator_forward.1} parent=1 // pred_check_branch
      %27 = sbr.rel (0) target = $region9
    $region8: #{aggregator_forward.1} parent=1 // pred_region
      _
    $region9: #{aggregator_forward.1} parent=1 // pred_fallthru
      _
    // Predicated region
    $region10: #{aggregator_forward.1} parent=1 // pred_check
      _
    $region11: #{aggregator_forward.1} parent=1 // pred_check_branch
      %29 = sbr.rel (0) target = $region13
    $region12: #{aggregator_forward.1} parent=1 // pred_region
      _
    $region13: #{aggregator_forward.1} parent=1 // pred_fallthru
      _
    // Predicated region
    $region14: #{aggregator_forward.1} parent=1 // pred_check
      _
    $region15: #{aggregator_forward.1} parent=1 // pred_check_branch
      %31 = sbr.rel (0) target = $region17
    $region16: #{aggregator_forward.1} parent=1 // pred_region
      _
    $region17: #{aggregator_forward.1} parent=1 // pred_fallthru
      _
    // Predicated region
    $region18: #{aggregator_forward.1} parent=1 // pred_check
      _
    $region19: #{aggregator_forward.1} parent=1 // pred_check_branch
      %33 = sbr.rel (0) target = $region21
    $region20: #{aggregator_forward.1} parent=1 // pred_region
      _
    $region21: #{aggregator_forward.1} parent=1 // pred_fallthru
      _
    // Predicated region
    $region22: #{aggregator_forward.1} parent=1 // pred_check
      _
    $region23: #{aggregator_forward.1} parent=1 // pred_check_branch
      %35 = sbr.rel (0) target = $region25
    $region24: #{aggregator_forward.1} parent=1 // pred_region
      _
    $region25: #{aggregator_forward.1} parent=1 // pred_fallthru
      _
    // Predicated region
    $region26: #{aggregator_forward.1} parent=1 // pred_check
      _
    $region27: #{aggregator_forward.1} parent=1 // pred_check_branch
      %37 = sbr.rel (0) target = $region29
    $region28: #{aggregator_forward.1} parent=1 // pred_region
      _
    $region29: #{aggregator_forward.1} parent=1 // pred_fallthru
      _
    // Predicated region
    $region30: #{aggregator_forward.1} parent=1 // pred_check
      _
    $region31: #{aggregator_forward.1} parent=1 // pred_check_branch
      %39 = sbr.rel (0) target = $region33
    $region32: #{aggregator_forward.1} parent=1 // pred_region
      _
    $region33: #{aggregator_forward.1} parent=1 // pred_fallthru
      _
    // Predicated region
    $region34: #{aggregator_forward.1} parent=1 // pred_check
      _
    $region35: #{aggregator_forward.1} parent=1 // pred_check_branch
      %41 = sbr.rel (0) target = $region37
    $region36: #{aggregator_forward.1} parent=1 // pred_region
      _
    $region37: #{aggregator_forward.1} parent=1 // pred_fallthru
      _
    // Predicated region
    $region38: #{aggregator_forward.1} parent=1 // pred_check
      _
    $region39: #{aggregator_forward.1} parent=1 // pred_check_branch
      %43 = sbr.rel (0) target = $region41
    $region40: #{aggregator_forward.1} parent=1 // pred_region
      _
    $region41: #{aggregator_forward.1} parent=1 // pred_fallthru
      _
    // Predicated region
    $region42: #{aggregator_forward.1} parent=1 // pred_check
      _
    $region43: #{aggregator_forward.1} parent=1 // pred_check_branch
      %45 = sbr.rel (0) target = $region45
    $region44: #{aggregator_forward.1} parent=1 // pred_region
      _
    $region45: #{aggregator_forward.1} parent=1 // pred_fallthru
      _
    // Predicated region
    $region46: #{aggregator_forward.1} parent=1 // pred_check
      _
    $region47: #{aggregator_forward.1} parent=1 // pred_check_branch
      %47 = sbr.rel (0) target = $region49
    $region48: #{aggregator_forward.1} parent=1 // pred_region
      _
    $region49: #{aggregator_forward.1} parent=1 // pred_fallthru
      _
    // Predicated region
    $region50: #{aggregator_forward.1} parent=1 // pred_check
      _
    $region51: #{aggregator_forward.1} parent=1 // pred_check_branch
      %49 = sbr.rel (0) target = $region53
    $region52: #{aggregator_forward.1} parent=1 // pred_region
      _
    $region53: #{aggregator_forward.1} parent=1 // pred_fallthru
      _
    // Predicated region
    $region54: #{aggregator_forward.1} parent=1 // pred_check
      _
    $region55: #{aggregator_forward.1} parent=1 // pred_check_branch
      %51 = sbr.rel (0) target = $region57
    $region56: #{aggregator_forward.1} parent=1 // pred_region
      _
    $region57: #{aggregator_forward.1} parent=1 // pred_fallthru
      _
    %v53 = vld [vmem:[%s0] sm:$0xff]
    %v54 = vld [vmem:[%s3] sm:$0xff]
    %v55 = vld [vmem:[%s3 + $0x8] sm:$0xff]
    %v56 = vld [vmem:[%s3 + $0x10] sm:$0xff]
    %v57 = vld [vmem:[%s3 + $0x18] sm:$0xff]
    %v58 = vld [vmem:[%s3 + $0x20] sm:$0xff]
    %v59 = vld [vmem:[%s3 + $0x28] sm:$0xff]
    %v60 = vpack.c.bf16 %v53, %v53
    %v61 = vpack.c.bf16 %v55, %v54
    %v62 = vpack.c.bf16 %v57, %v56
    %v63 = vpack.c.bf16 %v59, %v58
    %v64 = vld [vmem:[%s4] sm:$0x1]
    %v66 = vlaneseq
    %v67 = vshrl.u32 %v66, 7
    %v68 = vsub.s32 0, %v67
    %v69 = vrot.slane %v64, %v68
    %vm71 = vcmask 392192
    %v73 = vsel %vm71, %v60, 0
    %75 = vmatprep.subr.bf16.mxu0 0
    %76 = vmatpush1.bf16.msra.mxu0 %v61
    %77 = vmatprep.subr.bf16.mxu0 0
    %78 = vmatpush1.bf16.msra.mxu0 %v62
    %79 = vmatprep.subr.bf16.mxu0 0
    %80 = vmatpush1.bf16.msra.mxu0 %v63
    %81 = vmatprep.subr.bf16.mxu0 0
    %82 = vmatpush1.bf16.msra.mxu0 0
    %83 = vmatprep.subr.bf16.mxu0 0
    %84 = vmatpush1.bf16.msra.mxu0 0
    %85 = vmatprep.subr.bf16.mxu0 0
    %86 = vmatpush1.bf16.msra.mxu0 0
    %87 = vmatprep.subr.bf16.mxu0 0
    %88 = vmatpush1.bf16.msra.mxu0 0
    %89 = vmatprep.subr.bf16.mxu0 0
    %90 = vmatpush1.bf16.msra.mxu0 0
    %91 = vmatprep.subr.bf16.mxu0 0
    %92 = vmatpush1.bf16.msra.mxu0 0
    %93 = vmatprep.subr.bf16.mxu0 0
    %94 = vmatpush1.bf16.msra.mxu0 0
    %95 = vmatprep.subr.bf16.mxu0 0
    %96 = vmatpush1.bf16.msra.mxu0 0
    %97 = vmatprep.subr.bf16.mxu0 0
    %98 = vmatpush1.bf16.msra.mxu0 0
    %99 = vmatprep.subr.bf16.mxu0 0
    %100 = vmatpush1.bf16.msra.mxu0 0
    %101 = vmatprep.subr.bf16.mxu0 0
    %102 = vmatpush1.bf16.msra.mxu0 0
    %103 = vmatprep.subr.bf16.mxu0 0
    %104 = vmatpush1.bf16.msra.mxu0 0
    %105 = vmatprep.subr.bf16.mxu0 0
    %106 = vmatpush1.bf16.msra.mxu0 0
    %107 = vmatprep.mubr.bf16.mxu0 0
    %108 = vmatmul.mubr.bf16.gmra.mrb[0].mxu0 %v73
    %v109 = vpop.f32.mrb[0].mxu0
    %v110 = vadd.f32 %v69, %v109
    %v111 = vpop.f32.mrb[0].mxu0
    %v112 = vpop.f32.mrb[0].mxu0
    %v113 = vpop.f32.mrb[0].mxu0
    %114 = vdwg.mxu0
    %vm115 = vcmask 261120
    %116 = vst.msk [vmem:[#allocation3] sm:$0xff] %vm115, %v110
    %v117 = vld [vmem:[%s1] sm:$0xff]
    %v118 = vld [vmem:[%s1 + $0x8] sm:$0xff]
    %v119 = vld [vmem:[%s1 + $0x10] sm:$0xff]
    %v120 = vld [vmem:[%s1 + $0x18] sm:$0xff]
    %v121 = vld [vmem:[%s1 + $0x20] sm:$0xff]
    %v122 = vld [vmem:[%s1 + $0x28] sm:$0xff]
    %v123 = vld [vmem:[%s1 + $0x30] sm:$0xff]
    %v124 = vld [vmem:[%s1 + $0x38] sm:$0xff]
    %v125 = vld [vmem:[%s5] sm:$0xff]
    %v126 = vld [vmem:[%s5 + $0x8] sm:$0xff]
    %v127 = vld [vmem:[%s5 + $0x10] sm:$0xff]
    %v128 = vld [vmem:[%s5 + $0x18] sm:$0xff]
    %v129 = vld [vmem:[%s5 + $0x20] sm:$0xff]
    %v130 = vpack.c.bf16 %v118, %v117
    %v131 = vpack.c.bf16 %v120, %v119
    %v132 = vpack.c.bf16 %v122, %v121
    %v133 = vpack.c.bf16 %v124, %v123
    %v134 = vpack.c.bf16 %v126, %v125
    %v135 = vpack.c.bf16 %v128, %v127
    %v136 = vpack.c.bf16 %v129, %v129
    %v137 = vld [vmem:[%s6] sm:$0x1]
    %v139 = vlaneseq
    %v140 = vshrl.u32 %v139, 7
    %v141 = vsub.s32 0, %v140
    %v142 = vrot.slane %v137, %v141
    %vm144 = vcmask 326656
    %v146 = vsel %vm144, %v130, 0
    %v149 = vsel %vm144, %v131, 0
    %v152 = vsel %vm144, %v132, 0
    %v155 = vsel %vm144, %v133, 0
    %vm157 = vcmask 1043456
    %v159 = vsel %vm157, %v136, 0
    %161 = vmatprep.subr.bf16.mxu0 0
    %162 = vmatpush1.bf16.msra.mxu0 %v134
    %163 = vmatprep.subr.bf16.mxu0 0
    %164 = vmatpush1.bf16.msra.mxu0 %v135
    %165 = vmatprep.subr.bf16.mxu0 0
    %166 = vmatpush1.bf16.msra.mxu0 %v159
    %167 = vmatprep.subr.bf16.mxu0 0
    %168 = vmatpush1.bf16.msra.mxu0 0
    %169 = vmatprep.subr.bf16.mxu0 0
    %170 = vmatpush1.bf16.msra.mxu0 0
    %171 = vmatprep.subr.bf16.mxu0 0
    %172 = vmatpush1.bf16.msra.mxu0 0
    %173 = vmatprep.subr.bf16.mxu0 0
    %174 = vmatpush1.bf16.msra.mxu0 0
    %175 = vmatprep.subr.bf16.mxu0 0
    %176 = vmatpush1.bf16.msra.mxu0 0
    %177 = vmatprep.subr.bf16.mxu0 0
    %178 = vmatpush1.bf16.msra.mxu0 0
    %179 = vmatprep.subr.bf16.mxu0 0
    %180 = vmatpush1.bf16.msra.mxu0 0
    %181 = vmatprep.subr.bf16.mxu0 0
    %182 = vmatpush1.bf16.msra.mxu0 0
    %183 = vmatprep.subr.bf16.mxu0 0
    %184 = vmatpush1.bf16.msra.mxu0 0
    %185 = vmatprep.subr.bf16.mxu0 0
    %186 = vmatpush1.bf16.msra.mxu0 0
    %187 = vmatprep.subr.bf16.mxu0 0
    %188 = vmatpush1.bf16.msra.mxu0 0
    %189 = vmatprep.subr.bf16.mxu0 0
    %190 = vmatpush1.bf16.msra.mxu0 0
    %191 = vmatprep.subr.bf16.mxu0 0
    %192 = vmatpush1.bf16.msra.mxu0 0
    %193 = vmatprep.mubr.bf16.mxu0 0
    %194 = vmatmul.mubr.bf16.gmra.mrb[0].mxu0 %v146
    %v195 = vpop.f32.mrb[0].mxu0
    %v196 = vadd.f32 %v142, %v195
    %v197 = vpop.f32.mrb[0].mxu0
    %v198 = vpop.f32.mrb[0].mxu0
    %v199 = vadd.f32 %v142, %v198
    %v200 = vpop.f32.mrb[0].mxu0
    %201 = vmatprep.mubr.bf16.mxu0 0
    %202 = vmatmul.mubr.bf16.gmra.mrb[0].mxu0 %v149
    %v203 = vpop.f32.mrb[0].mxu0
    %v204 = vadd.f32 %v142, %v203
    %v205 = vpop.f32.mrb[0].mxu0
    %v206 = vpop.f32.mrb[0].mxu0
    %v207 = vadd.f32 %v142, %v206
    %v208 = vpop.f32.mrb[0].mxu0
    %209 = vmatprep.mubr.bf16.mxu0 0
    %210 = vmatmul.mubr.bf16.gmra.mrb[0].mxu0 %v152
    %v211 = vpop.f32.mrb[0].mxu0
    %v212 = vadd.f32 %v142, %v211
    %v213 = vpop.f32.mrb[0].mxu0
    %v214 = vpop.f32.mrb[0].mxu0
    %v215 = vadd.f32 %v142, %v214
    %v216 = vpop.f32.mrb[0].mxu0
    %217 = vmatprep.mubr.bf16.mxu0 0
    %218 = vmatmul.mubr.bf16.gmra.mrb[0].mxu0 %v155
    %v219 = vpop.f32.mrb[0].mxu0
    %v220 = vadd.f32 %v142, %v219
    %v221 = vpop.f32.mrb[0].mxu0
    %v222 = vpop.f32.mrb[0].mxu0
    %v223 = vadd.f32 %v142, %v222
    %v224 = vpop.f32.mrb[0].mxu0
    %225 = vdwg.mxu0
    %v226 = vld [vmem:[%s2] sm:$0xff]
    %v227 = vadd.f32 %v110, %v226
    %v228 = vld [vmem:[%s8] sm:$0xff]
    %v229 = vld [vmem:[%s8 + $0x8] sm:$0xff]
    %v230 = vld [vmem:[%s8 + $0x10] sm:$0xff]
    %v231 = vld [vmem:[%s8 + $0x18] sm:$0xff]
    %v232 = vpack.c.bf16 %v227, %v227
    %v233 = vpack.c.bf16 %v229, %v228
    %v234 = vpack.c.bf16 %v231, %v230
    %v236 = vsel %vm115, %v232, 0
    %238 = vmatprep.subr.bf16.mxu0 0
    %239 = vmatpush1.bf16.msra.mxu0 %v233
    %240 = vmatprep.subr.bf16.mxu0 0
    %241 = vmatpush1.bf16.msra.mxu0 %v234
    %242 = vmatprep.subr.bf16.mxu0 0
    %243 = vmatpush1.bf16.msra.mxu0 0
    %244 = vmatprep.subr.bf16.mxu0 0
    %245 = vmatpush1.bf16.msra.mxu0 0
    %246 = vmatprep.subr.bf16.mxu0 0
    %247 = vmatpush1.bf16.msra.mxu0 0
    %248 = vmatprep.subr.bf16.mxu0 0
    %249 = vmatpush1.bf16.msra.mxu0 0
    %250 = vmatprep.subr.bf16.mxu0 0
    %251 = vmatpush1.bf16.msra.mxu0 0
    %252 = vmatprep.subr.bf16.mxu0 0
    %253 = vmatpush1.bf16.msra.mxu0 0
    %254 = vmatprep.subr.bf16.mxu0 0
    %255 = vmatpush1.bf16.msra.mxu0 0
    %256 = vmatprep.subr.bf16.mxu0 0
    %257 = vmatpush1.bf16.msra.mxu0 0
    %258 = vmatprep.subr.bf16.mxu0 0
    %259 = vmatpush1.bf16.msra.mxu0 0
    %260 = vmatprep.subr.bf16.mxu0 0
    %261 = vmatpush1.bf16.msra.mxu0 0
    %262 = vmatprep.subr.bf16.mxu0 0
    %263 = vmatpush1.bf16.msra.mxu0 0
    %264 = vmatprep.subr.bf16.mxu0 0
    %265 = vmatpush1.bf16.msra.mxu0 0
    %266 = vmatprep.subr.bf16.mxu0 0
    %267 = vmatpush1.bf16.msra.mxu0 0
    %268 = vmatprep.subr.bf16.mxu0 0
    %269 = vmatpush1.bf16.msra.mxu0 0
    %270 = vmatprep.mubr.bf16.mxu0 0
    %271 = vmatmul.mubr.bf16.gmra.mrb[0].mxu0 %v236
    %v272 = vpop.f32.mrb[0].mxu0
    %v273 = vadd.f32 0.0, %v272
    %v274 = vpop.f32.mrb[0].mxu0
    %v275 = vpop.f32.mrb[0].mxu0
    %v276 = vpop.f32.mrb[0].mxu0
    %277 = vdwg.mxu0
    %v278 = vld [vmem:[%s7] sm:$0xff]
    %v279 = vld [vmem:[%s7 + $0x8] sm:$0xff]
    %v280 = vld [vmem:[%s7 + $0x10] sm:$0xff]
    %v281 = vld [vmem:[%s7 + $0x18] sm:$0xff]
    %v282 = vpack.c.bf16 %v199, %v196
    %v283 = vpack.c.bf16 %v207, %v204
    %v284 = vpack.c.bf16 %v215, %v212
    %v285 = vpack.c.bf16 %v223, %v220
    %v286 = vpack.c.bf16 %v279, %v278
    %v287 = vpack.c.bf16 %v281, %v280
    %v288 = vld [vmem:[%s9] sm:$0x1]
    %v290 = vlaneseq
    %v291 = vshrl.u32 %v290, 7
    %v292 = vsub.s32 0, %v291
    %v293 = vrot.slane %v288, %v292
    %v296 = vsel %vm115, %v282, 0
    %v299 = vsel %vm115, %v283, 0
    %v302 = vsel %vm115, %v284, 0
    %v305 = vsel %vm115, %v285, 0
    %307 = vmatprep.subr.bf16.mxu0 0
    %308 = vmatpush1.bf16.msra.mxu0 %v286
    %309 = vmatprep.subr.bf16.mxu0 0
    %310 = vmatpush1.bf16.msra.mxu0 %v287
    %311 = vmatprep.subr.bf16.mxu0 0
    %312 = vmatpush1.bf16.msra.mxu0 0
    %313 = vmatprep.subr.bf16.mxu0 0
    %314 = vmatpush1.bf16.msra.mxu0 0
    %315 = vmatprep.subr.bf16.mxu0 0
    %316 = vmatpush1.bf16.msra.mxu0 0
    %317 = vmatprep.subr.bf16.mxu0 0
    %318 = vmatpush1.bf16.msra.mxu0 0
    %319 = vmatprep.subr.bf16.mxu0 0
    %320 = vmatpush1.bf16.msra.mxu0 0
    %321 = vmatprep.subr.bf16.mxu0 0
    %322 = vmatpush1.bf16.msra.mxu0 0
    %323 = vmatprep.subr.bf16.mxu0 0
    %324 = vmatpush1.bf16.msra.mxu0 0
    %325 = vmatprep.subr.bf16.mxu0 0
    %326 = vmatpush1.bf16.msra.mxu0 0
    %327 = vmatprep.subr.bf16.mxu0 0
    %328 = vmatpush1.bf16.msra.mxu0 0
    %329 = vmatprep.subr.bf16.mxu0 0
    %330 = vmatpush1.bf16.msra.mxu0 0
    %331 = vmatprep.subr.bf16.mxu0 0
    %332 = vmatpush1.bf16.msra.mxu0 0
    %333 = vmatprep.subr.bf16.mxu0 0
    %334 = vmatpush1.bf16.msra.mxu0 0
    %335 = vmatprep.subr.bf16.mxu0 0
    %336 = vmatpush1.bf16.msra.mxu0 0
    %337 = vmatprep.subr.bf16.mxu0 0
    %338 = vmatpush1.bf16.msra.mxu0 0
    %339 = vmatprep.mubr.bf16.mxu0 0
    %340 = vmatmul.mubr.bf16.gmra.mrb[0].mxu0 %v296
    %v341 = vpop.f32.mrb[0].mxu0
    %v342 = vadd.f32 %v293, %v341
    %v343 = vpop.f32.mrb[0].mxu0
    %v344 = vpop.f32.mrb[0].mxu0
    %v345 = vadd.f32 %v293, %v344
    %v346 = vpop.f32.mrb[0].mxu0
    %347 = vmatprep.mubr.bf16.mxu0 0
    %348 = vmatmul.mubr.bf16.gmra.mrb[0].mxu0 %v299
    %v349 = vpop.f32.mrb[0].mxu0
    %v350 = vadd.f32 %v293, %v349
    %v351 = vpop.f32.mrb[0].mxu0
    %v352 = vpop.f32.mrb[0].mxu0
    %v353 = vadd.f32 %v293, %v352
    %v354 = vpop.f32.mrb[0].mxu0
    %355 = vmatprep.mubr.bf16.mxu0 0
    %356 = vmatmul.mubr.bf16.gmra.mrb[0].mxu0 %v302
    %v357 = vpop.f32.mrb[0].mxu0
    %v358 = vadd.f32 %v293, %v357
    %v359 = vpop.f32.mrb[0].mxu0
    %v360 = vpop.f32.mrb[0].mxu0
    %v361 = vadd.f32 %v293, %v360
    %v362 = vpop.f32.mrb[0].mxu0
    %363 = vmatprep.mubr.bf16.mxu0 0
    %364 = vmatmul.mubr.bf16.gmra.mrb[0].mxu0 %v305
    %v365 = vpop.f32.mrb[0].mxu0
    %v366 = vadd.f32 %v293, %v365
    %v367 = vpop.f32.mrb[0].mxu0
    %v368 = vpop.f32.mrb[0].mxu0
    %v369 = vadd.f32 %v293, %v368
    %v370 = vpop.f32.mrb[0].mxu0
    %371 = vdwg.mxu0
    %v373 = vcombine.high %v273, %v273
    %v375 = vunpack.c.l.s4 1966171168
    %v376 = vunpack.c.0.s8 %v375
    %v377 = vlaneseq
    %v378 = vshrl.u32 %v377, 7
    %v379 = vsub.s32 %v376, %v378
    %v380 = vrot.slane %v273, %v379
    %v382 = vunpack.c.l.s4 1966171168
    %v383 = vunpack.c.0.s8 %v382
    %v384 = vlaneseq
    %v385 = vshrl.u32 %v384, 7
    %v386 = vsub.s32 %v383, %v385
    %v387 = vrot.slane %v373, %v386
    %v388 = vcombine.high %v380, %v380
    %v389 = vcombine.high %v387, %v387
    %v391 = vunpack.c.l.s4 1966171168
    %v392 = vunpack.c.0.s8 %v391
    %v393 = vlaneseq
    %v394 = vshrl.u32 %v393, 7
    %v395 = vsub.s32 %v392, %v394
    %v396 = vrot.slane %v380, %v395
    %v398 = vunpack.c.l.s4 1966171168
    %v399 = vunpack.c.0.s8 %v398
    %v400 = vlaneseq
    %v401 = vshrl.u32 %v400, 7
    %v402 = vsub.s32 %v399, %v401
    %v403 = vrot.slane %v387, %v402
    %v405 = vunpack.c.l.s4 1966171168
    %v406 = vunpack.c.0.s8 %v405
    %v407 = vlaneseq
    %v408 = vshrl.u32 %v407, 7
    %v409 = vsub.s32 %v406, %v408
    %v410 = vrot.slane %v388, %v409
    %v412 = vunpack.c.l.s4 1966171168
    %v413 = vunpack.c.0.s8 %v412
    %v414 = vlaneseq
    %v415 = vshrl.u32 %v414, 7
    %v416 = vsub.s32 %v413, %v415
    %v417 = vrot.slane %v389, %v416
    %v418 = vcombine.high %v396, %v396
    %v419 = vcombine.high %v403, %v403
    %v420 = vcombine.high %v410, %v410
    %v421 = vcombine.high %v417, %v417
    %v422 = vlaneseq
    %v423 = vshrl.u32 %v422, 7
    %v424 = vsub.s32 0, %v423
    %v425 = vrot.slane %v396, %v424
    %v426 = vlaneseq
    %v427 = vshrl.u32 %v426, 7
    %v428 = vsub.s32 0, %v427
    %v429 = vrot.slane %v410, %v428
    %v430 = vlaneseq
    %v431 = vshrl.u32 %v430, 7
    %v432 = vsub.s32 0, %v431
    %v433 = vrot.slane %v418, %v432
    %v434 = vlaneseq
    %v435 = vshrl.u32 %v434, 7
    %v436 = vsub.s32 0, %v435
    %v437 = vrot.slane %v420, %v436
    %v438 = vlaneseq
    %v439 = vshrl.u32 %v438, 7
    %v440 = vsub.s32 0, %v439
    %v441 = vrot.slane %v403, %v440
    %v442 = vlaneseq
    %v443 = vshrl.u32 %v442, 7
    %v444 = vsub.s32 0, %v443
    %v445 = vrot.slane %v417, %v444
    %v446 = vlaneseq
    %v447 = vshrl.u32 %v446, 7
    %v448 = vsub.s32 0, %v447
    %v449 = vrot.slane %v419, %v448
    %v450 = vlaneseq
    %v451 = vshrl.u32 %v450, 7
    %v452 = vsub.s32 0, %v451
    %v453 = vrot.slane %v421, %v452
    %v462 = vadd.f32 %v342, %v425
    %v463 = vadd.f32 %v345, %v429
    %v464 = vadd.f32 %v350, %v433
    %v465 = vadd.f32 %v353, %v437
    %v466 = vadd.f32 %v358, %v441
    %v467 = vadd.f32 %v361, %v445
    %v468 = vadd.f32 %v366, %v449
    %v469 = vadd.f32 %v369, %v453
    %v470 = vmax.f32 %v462, 0.0
    %v471 = vmax.f32 %v463, 0.0
    %v472 = vmax.f32 %v464, 0.0
    %v473 = vmax.f32 %v465, 0.0
    %v474 = vmax.f32 %v466, 0.0
    %v475 = vmax.f32 %v467, 0.0
    %v476 = vmax.f32 %v468, 0.0
    %v477 = vmax.f32 %v469, 0.0
    %v478 = vld [vmem:[%s10] sm:$0xff]
    %v479 = vld [vmem:[%s10 + $0x8] sm:$0xff]
    %v480 = vld [vmem:[%s10 + $0x10] sm:$0xff]
    %v481 = vld [vmem:[%s10 + $0x18] sm:$0xff]
    %v482 = vpack.c.bf16 %v471, %v470
    %v483 = vpack.c.bf16 %v473, %v472
    %v484 = vpack.c.bf16 %v475, %v474
    %v485 = vpack.c.bf16 %v477, %v476
    %v486 = vpack.c.bf16 %v479, %v478
    %v487 = vpack.c.bf16 %v481, %v480
    %v488 = vld [vmem:[%s11] sm:$0x1]
    %v490 = vlaneseq
    %v491 = vshrl.u32 %v490, 7
    %v492 = vsub.s32 0, %v491
    %v493 = vrot.slane %v488, %v492
    %v496 = vsel %vm115, %v482, 0
    %v499 = vsel %vm115, %v483, 0
    %v502 = vsel %vm115, %v484, 0
    %v505 = vsel %vm115, %v485, 0
    %507 = vmatprep.subr.bf16.mxu0 0
    %508 = vmatpush1.bf16.msra.mxu0 %v486
    %509 = vmatprep.subr.bf16.mxu0 0
    %510 = vmatpush1.bf16.msra.mxu0 %v487
    %511 = vmatprep.subr.bf16.mxu0 0
    %512 = vmatpush1.bf16.msra.mxu0 0
    %513 = vmatprep.subr.bf16.mxu0 0
    %514 = vmatpush1.bf16.msra.mxu0 0
    %515 = vmatprep.subr.bf16.mxu0 0
    %516 = vmatpush1.bf16.msra.mxu0 0
    %517 = vmatprep.subr.bf16.mxu0 0
    %518 = vmatpush1.bf16.msra.mxu0 0
    %519 = vmatprep.subr.bf16.mxu0 0
    %520 = vmatpush1.bf16.msra.mxu0 0
    %521 = vmatprep.subr.bf16.mxu0 0
    %522 = vmatpush1.bf16.msra.mxu0 0
    %523 = vmatprep.subr.bf16.mxu0 0
    %524 = vmatpush1.bf16.msra.mxu0 0
    %525 = vmatprep.subr.bf16.mxu0 0
    %526 = vmatpush1.bf16.msra.mxu0 0
    %527 = vmatprep.subr.bf16.mxu0 0
    %528 = vmatpush1.bf16.msra.mxu0 0
    %529 = vmatprep.subr.bf16.mxu0 0
    %530 = vmatpush1.bf16.msra.mxu0 0
    %531 = vmatprep.subr.bf16.mxu0 0
    %532 = vmatpush1.bf16.msra.mxu0 0
    %533 = vmatprep.subr.bf16.mxu0 0
    %534 = vmatpush1.bf16.msra.mxu0 0
    %535 = vmatprep.subr.bf16.mxu0 0
    %536 = vmatpush1.bf16.msra.mxu0 0
    %537 = vmatprep.subr.bf16.mxu0 0
    %538 = vmatpush1.bf16.msra.mxu0 0
    %539 = vmatprep.mubr.bf16.mxu0 0
    %540 = vmatmul.mubr.bf16.gmra.mrb[0].mxu0 %v496
    %v541 = vpop.f32.mrb[0].mxu0
    %v542 = vadd.f32 %v493, %v541
    %v543 = vpop.f32.mrb[0].mxu0
    %v544 = vpop.f32.mrb[0].mxu0
    %v545 = vadd.f32 %v493, %v544
    %v546 = vpop.f32.mrb[0].mxu0
    %547 = vmatprep.mubr.bf16.mxu0 0
    %548 = vmatmul.mubr.bf16.gmra.mrb[0].mxu0 %v499
    %v549 = vpop.f32.mrb[0].mxu0
    %v550 = vadd.f32 %v493, %v549
    %v551 = vpop.f32.mrb[0].mxu0
    %v552 = vpop.f32.mrb[0].mxu0
    %v553 = vadd.f32 %v493, %v552
    %v554 = vpop.f32.mrb[0].mxu0
    %555 = vmatprep.mubr.bf16.mxu0 0
    %556 = vmatmul.mubr.bf16.gmra.mrb[0].mxu0 %v502
    %v557 = vpop.f32.mrb[0].mxu0
    %v558 = vadd.f32 %v493, %v557
    %v559 = vpop.f32.mrb[0].mxu0
    %v560 = vpop.f32.mrb[0].mxu0
    %v561 = vadd.f32 %v493, %v560
    %v562 = vpop.f32.mrb[0].mxu0
    %563 = vmatprep.mubr.bf16.mxu0 0
    %564 = vmatmul.mubr.bf16.gmra.mrb[0].mxu0 %v505
    %v565 = vpop.f32.mrb[0].mxu0
    %v566 = vadd.f32 %v493, %v565
    %v567 = vpop.f32.mrb[0].mxu0
    %v568 = vpop.f32.mrb[0].mxu0
    %v569 = vadd.f32 %v493, %v568
    %v570 = vpop.f32.mrb[0].mxu0
    %571 = vdwg.mxu0
    %v572 = vmax.f32 %v542, 0.0
    %v573 = vmax.f32 %v545, 0.0
    %v574 = vmax.f32 %v550, 0.0
    %v575 = vmax.f32 %v553, 0.0
    %v576 = vmax.f32 %v558, 0.0
    %v577 = vmax.f32 %v561, 0.0
    %v578 = vmax.f32 %v566, 0.0
    %v579 = vmax.f32 %v569, 0.0
    %v580 = vld [vmem:[%s12] sm:$0x1]
    %v582 = vlaneseq
    %v583 = vshrl.u32 %v582, 7
    %v584 = vsub.s32 0, %v583
    %v585 = vrot.slane %v580, %v584
    %v587 = vmul.f32 %v572, %v585
    %v588 = vmul.f32 %v573, %v585
    %v589 = vmul.f32 %v574, %v585
    %v590 = vmul.f32 %v575, %v585
    %v591 = vmul.f32 %v576, %v585
    %v592 = vmul.f32 %v577, %v585
    %v593 = vmul.f32 %v578, %v585
    %v594 = vmul.f32 %v579, %v585
    %v595 = vsel %vm115, %v587, 0.0
    %596 = vadd.xlane.f32.xlu0 %v595
    %v597 = vpop.xlane.xlu0 %596
    %v598 = vsel %vm115, %v588, 0.0
    %599 = vadd.xlane.f32.xlu0 %v598
    %v600 = vpop.xlane.xlu0 %599
    %v601 = vsel %vm115, %v589, 0.0
    %602 = vadd.xlane.f32.xlu0 %v601
    %v603 = vpop.xlane.xlu0 %602
    %v604 = vsel %vm115, %v590, 0.0
    %605 = vadd.xlane.f32.xlu0 %v604
    %v606 = vpop.xlane.xlu0 %605
    %v607 = vsel %vm115, %v591, 0.0
    %608 = vadd.xlane.f32.xlu0 %v607
    %v609 = vpop.xlane.xlu0 %608
    %v610 = vsel %vm115, %v592, 0.0
    %611 = vadd.xlane.f32.xlu0 %v610
    %v612 = vpop.xlane.xlu0 %611
    %v613 = vsel %vm115, %v593, 0.0
    %614 = vadd.xlane.f32.xlu0 %v613
    %v615 = vpop.xlane.xlu0 %614
    %v616 = vsel %vm115, %v594, 0.0
    %617 = vadd.xlane.f32.xlu0 %v616
    %v618 = vpop.xlane.xlu0 %617
    %v619 = vld [vmem:[#allocation2] sm:$0x1]
    %v621 = vlaneseq
    %v622 = vshrl.u32 %v621, 7
    %v623 = vsub.s32 0, %v622
    %v624 = vrot.slane %v619, %v623
    %v626 = vadd.f32 %v597, %v624
    %v627 = vadd.f32 %v600, %v624
    %v628 = vadd.f32 %v603, %v624
    %v629 = vadd.f32 %v606, %v624
    %v630 = vadd.f32 %v609, %v624
    %v631 = vadd.f32 %v612, %v624
    %v632 = vadd.f32 %v615, %v624
    %v633 = vadd.f32 %v618, %v624
    %vm634 = vcmask 7168
    %v635 = vsel %vm634, %v626, -inf
    %v636 = vrot.slane %v635, 4
    %v637 = vmax.f32 %v635, %v636
    %v638 = vrot.slane %v637, 2
    %v639 = vmax.f32 %v637, %v638
    %v640 = vrot.slane %v639, 1
    %v641 = vmax.f32 %v639, %v640
    %v642 = vsel %vm634, %v627, -inf
    %v643 = vrot.slane %v642, 4
    %v644 = vmax.f32 %v642, %v643
    %v645 = vrot.slane %v644, 2
    %v646 = vmax.f32 %v644, %v645
    %v647 = vrot.slane %v646, 1
    %v648 = vmax.f32 %v646, %v647
    %v649 = vsel %vm634, %v628, -inf
    %v650 = vrot.slane %v649, 4
    %v651 = vmax.f32 %v649, %v650
    %v652 = vrot.slane %v651, 2
    %v653 = vmax.f32 %v651, %v652
    %v654 = vrot.slane %v653, 1
    %v655 = vmax.f32 %v653, %v654
    %v656 = vsel %vm634, %v629, -inf
    %v657 = vrot.slane %v656, 4
    %v658 = vmax.f32 %v656, %v657
    %v659 = vrot.slane %v658, 2
    %v660 = vmax.f32 %v658, %v659
    %v661 = vrot.slane %v660, 1
    %v662 = vmax.f32 %v660, %v661
    %v663 = vsel %vm634, %v630, -inf
    %v664 = vrot.slane %v663, 4
    %v665 = vmax.f32 %v663, %v664
    %v666 = vrot.slane %v665, 2
    %v667 = vmax.f32 %v665, %v666
    %v668 = vrot.slane %v667, 1
    %v669 = vmax.f32 %v667, %v668
    %v670 = vsel %vm634, %v631, -inf
    %v671 = vrot.slane %v670, 4
    %v672 = vmax.f32 %v670, %v671
    %v673 = vrot.slane %v672, 2
    %v674 = vmax.f32 %v672, %v673
    %v675 = vrot.slane %v674, 1
    %v676 = vmax.f32 %v674, %v675
    %v677 = vsel %vm634, %v632, -inf
    %v678 = vrot.slane %v677, 4
    %v679 = vmax.f32 %v677, %v678
    %v680 = vrot.slane %v679, 2
    %v681 = vmax.f32 %v679, %v680
    %v682 = vrot.slane %v681, 1
    %v683 = vmax.f32 %v681, %v682
    %v684 = vsel %vm634, %v633, -inf
    %v685 = vrot.slane %v684, 4
    %v686 = vmax.f32 %v684, %v685
    %v687 = vrot.slane %v686, 2
    %v688 = vmax.f32 %v686, %v687
    %v689 = vrot.slane %v688, 1
    %v690 = vmax.f32 %v688, %v689
    %v691 = vsub.f32 %v626, %v641
    %v692 = vsub.f32 %v627, %v648
    %v693 = vsub.f32 %v628, %v655
    %v694 = vsub.f32 %v629, %v662
    %v695 = vsub.f32 %v630, %v669
    %v696 = vsub.f32 %v631, %v676
    %v697 = vsub.f32 %v632, %v683
    %v698 = vsub.f32 %v633, %v690
    %v699 = vmul.f32 %v691, 1.442695
    %v700 = vpow.pop %v699
    %v701 = vmul.f32 %v692, 1.442695
    %v702 = vpow.pop %v701
    %v703 = vmul.f32 %v693, 1.442695
    %v704 = vpow.pop %v703
    %v705 = vmul.f32 %v694, 1.442695
    %v706 = vpow.pop %v705
    %v707 = vmul.f32 %v695, 1.442695
    %v708 = vpow.pop %v707
    %v709 = vmul.f32 %v696, 1.442695
    %v710 = vpow.pop %v709
    %v711 = vmul.f32 %v697, 1.442695
    %v712 = vpow.pop %v711
    %v713 = vmul.f32 %v698, 1.442695
    %v714 = vpow.pop %v713
    %v715 = vsel %vm634, %v700, 0.0
    %v716 = vrot.slane %v715, 4
    %v717 = vadd.f32 %v715, %v716
    %v718 = vrot.slane %v717, 2
    %v719 = vadd.f32 %v717, %v718
    %v720 = vrot.slane %v719, 1
    %v721 = vadd.f32 %v719, %v720
    %v722 = vsel %vm634, %v702, 0.0
    %v723 = vrot.slane %v722, 4
    %v724 = vadd.f32 %v722, %v723
    %v725 = vrot.slane %v724, 2
    %v726 = vadd.f32 %v724, %v725
    %v727 = vrot.slane %v726, 1
    %v728 = vadd.f32 %v726, %v727
    %v729 = vsel %vm634, %v704, 0.0
    %v730 = vrot.slane %v729, 4
    %v731 = vadd.f32 %v729, %v730
    %v732 = vrot.slane %v731, 2
    %v733 = vadd.f32 %v731, %v732
    %v734 = vrot.slane %v733, 1
    %v735 = vadd.f32 %v733, %v734
    %v736 = vsel %vm634, %v706, 0.0
    %v737 = vrot.slane %v736, 4
    %v738 = vadd.f32 %v736, %v737
    %v739 = vrot.slane %v738, 2
    %v740 = vadd.f32 %v738, %v739
    %v741 = vrot.slane %v740, 1
    %v742 = vadd.f32 %v740, %v741
    %v743 = vsel %vm634, %v708, 0.0
    %v744 = vrot.slane %v743, 4
    %v745 = vadd.f32 %v743, %v744
    %v746 = vrot.slane %v745, 2
    %v747 = vadd.f32 %v745, %v746
    %v748 = vrot.slane %v747, 1
    %v749 = vadd.f32 %v747, %v748
    %v750 = vsel %vm634, %v710, 0.0
    %v751 = vrot.slane %v750, 4
    %v752 = vadd.f32 %v750, %v751
    %v753 = vrot.slane %v752, 2
    %v754 = vadd.f32 %v752, %v753
    %v755 = vrot.slane %v754, 1
    %v756 = vadd.f32 %v754, %v755
    %v757 = vsel %vm634, %v712, 0.0
    %v758 = vrot.slane %v757, 4
    %v759 = vadd.f32 %v757, %v758
    %v760 = vrot.slane %v759, 2
    %v761 = vadd.f32 %v759, %v760
    %v762 = vrot.slane %v761, 1
    %v763 = vadd.f32 %v761, %v762
    %v764 = vsel %vm634, %v714, 0.0
    %v765 = vrot.slane %v764, 4
    %v766 = vadd.f32 %v764, %v765
    %v767 = vrot.slane %v766, 2
    %v768 = vadd.f32 %v766, %v767
    %v769 = vrot.slane %v768, 1
    %v770 = vadd.f32 %v768, %v769
    %v771 = vrcp.pop %v721
    %v772 = vrcp.pop %v728
    %v773 = vrcp.pop %v735
    %v774 = vrcp.pop %v742
    %v775 = vrcp.pop %v749
    %v776 = vrcp.pop %v756
    %v777 = vrcp.pop %v763
    %v778 = vrcp.pop %v770
    %v779 = vmul.f32 %v700, %v771
    %v780 = vmul.f32 %v702, %v772
    %v781 = vmul.f32 %v704, %v773
    %v782 = vmul.f32 %v706, %v774
    %v783 = vmul.f32 %v708, %v775
    %v784 = vmul.f32 %v710, %v776
    %v785 = vmul.f32 %v712, %v777
    %v786 = vmul.f32 %v714, %v778
    %788 = vset.pattern.permute.xlu0 0
    %789 = vperm.xlu0 %788, %v779
    %v790 = vpop.permute.xlu0 %789
    %793 = vset.pattern.permute.xlu0 0
    %794 = vperm.xlu0 %793, %v780
    %v795 = vpop.permute.xlu0 %794
    %798 = vset.pattern.permute.xlu0 0
    %799 = vperm.xlu0 %798, %v781
    %v800 = vpop.permute.xlu0 %799
    %803 = vset.pattern.permute.xlu0 0
    %804 = vperm.xlu0 %803, %v782
    %v805 = vpop.permute.xlu0 %804
    %808 = vset.pattern.permute.xlu0 0
    %809 = vperm.xlu0 %808, %v783
    %v810 = vpop.permute.xlu0 %809
    %813 = vset.pattern.permute.xlu0 0
    %814 = vperm.xlu0 %813, %v784
    %v815 = vpop.permute.xlu0 %814
    %818 = vset.pattern.permute.xlu0 0
    %819 = vperm.xlu0 %818, %v785
    %v820 = vpop.permute.xlu0 %819
    %823 = vset.pattern.permute.xlu0 0
    %824 = vperm.xlu0 %823, %v786
    %v825 = vpop.permute.xlu0 %824
    %v827 = vmul.f32 %v790, %v196
    %v828 = vmul.f32 %v795, %v199
    %v829 = vmul.f32 %v800, %v204
    %v830 = vmul.f32 %v805, %v207
    %v831 = vmul.f32 %v810, %v212
    %v832 = vmul.f32 %v815, %v215
    %v833 = vmul.f32 %v820, %v220
    %v834 = vmul.f32 %v825, %v223
    %v835 = vsel %vm115, %v827, 0.0
    %v836 = vrot.slane %v835, 4
    %v837 = vadd.f32 %v835, %v836
    %v838 = vrot.slane %v837, 2
    %v839 = vadd.f32 %v837, %v838
    %v840 = vrot.slane %v839, 1
    %v841 = vadd.f32 %v839, %v840
    %v842 = vsel %vm115, %v828, 0.0
    %v843 = vrot.slane %v842, 4
    %v844 = vadd.f32 %v842, %v843
    %v845 = vrot.slane %v844, 2
    %v846 = vadd.f32 %v844, %v845
    %v847 = vrot.slane %v846, 1
    %v848 = vadd.f32 %v846, %v847
    %v849 = vsel %vm115, %v829, 0.0
    %v850 = vrot.slane %v849, 4
    %v851 = vadd.f32 %v849, %v850
    %v852 = vrot.slane %v851, 2
    %v853 = vadd.f32 %v851, %v852
    %v854 = vrot.slane %v853, 1
    %v855 = vadd.f32 %v853, %v854
    %v856 = vsel %vm115, %v830, 0.0
    %v857 = vrot.slane %v856, 4
    %v858 = vadd.f32 %v856, %v857
    %v859 = vrot.slane %v858, 2
    %v860 = vadd.f32 %v858, %v859
    %v861 = vrot.slane %v860, 1
    %v862 = vadd.f32 %v860, %v861
    %v863 = vsel %vm115, %v831, 0.0
    %v864 = vrot.slane %v863, 4
    %v865 = vadd.f32 %v863, %v864
    %v866 = vrot.slane %v865, 2
    %v867 = vadd.f32 %v865, %v866
    %v868 = vrot.slane %v867, 1
    %v869 = vadd.f32 %v867, %v868
    %v870 = vsel %vm115, %v832, 0.0
    %v871 = vrot.slane %v870, 4
    %v872 = vadd.f32 %v870, %v871
    %v873 = vrot.slane %v872, 2
    %v874 = vadd.f32 %v872, %v873
    %v875 = vrot.slane %v874, 1
    %v876 = vadd.f32 %v874, %v875
    %v877 = vsel %vm115, %v833, 0.0
    %v878 = vrot.slane %v877, 4
    %v879 = vadd.f32 %v877, %v878
    %v880 = vrot.slane %v879, 2
    %v881 = vadd.f32 %v879, %v880
    %v882 = vrot.slane %v881, 1
    %v883 = vadd.f32 %v881, %v882
    %v884 = vsel %vm115, %v834, 0.0
    %v885 = vrot.slane %v884, 4
    %v886 = vadd.f32 %v884, %v885
    %v887 = vrot.slane %v886, 2
    %v888 = vadd.f32 %v886, %v887
    %v889 = vrot.slane %v888, 1
    %v890 = vadd.f32 %v888, %v889
    %vm899 = vcmask 1041409
    %v900 = vsel %vm899, %v848, %v841
    %vm901 = vcmask 1042434
    %v902 = vsel %vm901, %v855, %v900
    %vm903 = vcmask 1043459
    %v904 = vsel %vm903, %v862, %v902
    %vm905 = vcmask 1044484
    %v906 = vsel %vm905, %v869, %v904
    %vm907 = vcmask 1045509
    %v908 = vsel %vm907, %v876, %v906
    %vm909 = vcmask 1046534
    %v910 = vsel %vm909, %v883, %v908
    %vm911 = vcmask 1047559
    %v912 = vsel %vm911, %v890, %v910
    %914 = vst.msk [vmem:[%s15] sm:$0xff] %vm115, %v912
    // Predicated region
    $region58: #{aggregator_forward.1} parent=1 // pred_check
      _
    $region59: #{aggregator_forward.1} parent=1 // pred_check_branch
      %916 = sbr.rel (0) target = $region61
    $region60: #{aggregator_forward.1} parent=1 // pred_region
      %s918 = ssub.s32 128, 128
      %919 = vsyncadd [#allocation4], %s918
      %s921 = sshll.u32 [#allocation3], 4
      %s922 = int_to_ptr.vmem [resolvable:$true] %s921
      %924 = dma.vmem_to_hbm [thread:$0]  %s922, 128, %s14, [#allocation4]
    $region61: #{aggregator_forward.1} parent=1 // pred_fallthru
      _
    // Predicated region
    $region62: #{aggregator_forward.1} parent=1 // pred_check
      _
    $region63: #{aggregator_forward.1} parent=1 // pred_check_branch
      %926 = sbr.rel (0) target = $region65
    $region64: #{aggregator_forward.1} parent=1 // pred_region
      _
    $region65: #{aggregator_forward.1} parent=1 // pred_fallthru
      _
    // Predicated region
    $region66: #{aggregator_forward.1} parent=1 // pred_check
      _
    $region67: #{aggregator_forward.1} parent=1 // pred_check_branch
      %928 = sbr.rel (0) target = $region69
    $region68: #{aggregator_forward.1} parent=1 // pred_region
      %929 = dma.done [#allocation4], 128
    $region69: #{aggregator_forward.1} parent=1 // pred_fallthru
      _
    // Predicated region
    $region70: #{aggregator_forward.1} parent=1 // pred_check
      _
    $region71: #{aggregator_forward.1} parent=1 // pred_check_branch
      %931 = sbr.rel (0) target = $region73
    $region72: #{aggregator_forward.1} parent=1 // pred_region
      _
    $region73: #{aggregator_forward.1} parent=1 // pred_fallthru
      _
    %932 = vsyncpa [#allocation4], 1

</llo_original>
